<compile_context>
chip_gen: v6e
topology: v6e:2x2x1
jax: 0.10.0
libtpu: 0.0.40
codegen_flags: <defaults>
</compile_context>

<pallas_src>
import jax
import jax.numpy as jnp
from jax.experimental import pallas as pl
from jax.experimental.pallas import tpu as pltpu


def _siamese_head_kernel(x0_ref, x1_ref, w_ref, b_ref, o0_ref, o1_ref):
    w = w_ref[...]            # (C_out, C_in) bf16, resident across grid steps
    b = b_ref[...]            # (C_out, 1)   f32

    def _branch(x_ref, o_ref):
        # 1x1 conv over channels == channel matmul on the MXU; f32 accumulation.
        y = jnp.dot(w, x_ref[...], preferred_element_type=jnp.float32)  # (C_out, tp)
        y = y + b
        # L2 normalize over channels (sublane axis), matching
        # torch.nn.functional.normalize(x, p=2, dim=1, eps=1e-12):
        #   x / max(||x||, 1e-12) == x * rsqrt(max(||x||^2, 1e-24))
        ssq = jnp.sum(y * y, axis=0, keepdims=True)                     # (1, tp)
        inv = jax.lax.rsqrt(jnp.maximum(ssq, 1e-24))
        o_ref[...] = (y * inv).astype(o_ref.dtype)

    _branch(x0_ref, o0_ref)
    _branch(x1_ref, o1_ref)


def siamese_conv1x1_l2norm(x0_nchw, x1_nchw, w_oc, b_o, *, tp=512, out_dtype=None):
    """Fused Siamese head: shared 1x1 conv (bf16 MXU, f32 accum) + per-pixel L2 norm.

    x*_nchw : (N, C_in, H, W)      NCHW feature maps (c4-like, shared weights)
    w_oc    : (C_out, C_in)        1x1 conv weight (kernel spatial dims squeezed)
    b_o     : (C_out,) or (C_out,1) conv bias
    Returns two (N, C_out, H, W) arrays, L2-normalized over channels.
    """
    assert x0_nchw.shape == x1_nchw.shape
    N, C_in, H, W = x0_nchw.shape
    C_out = w_oc.shape[0]
    out_dtype = out_dtype or x0_nchw.dtype

    LANE = 128
    P = H * W
    # Lane-align the pixel axis and pick the largest lane-multiple tile <= tp.
    P_lane = pl.cdiv(P, LANE) * LANE
    tp = max(LANE, min((tp // LANE) * LANE, P_lane))
    P_pad = pl.cdiv(P_lane, tp) * tp

    def prep(x):
        # Free reshape (no transpose); bf16 halves activation DMA traffic.
        x = x.reshape(N, C_in, P).astype(jnp.bfloat16)
        if P_pad != P:
            x = jnp.pad(x, ((0, 0), (0, 0), (0, P_pad - P)))
        return x

    x0 = prep(x0_nchw)
    x1 = prep(x1_nchw)
    w = w_oc.astype(jnp.bfloat16)
    b = jnp.asarray(b_o, jnp.float32).reshape(C_out, 1)

    grid = (N, P_pad // tp)
    x_spec = pl.BlockSpec((None, C_in, tp), lambda n, j: (n, 0, j))
    o_spec = pl.BlockSpec((None, C_out, tp), lambda n, j: (n, 0, j))
    w_spec = pl.BlockSpec((C_out, C_in), lambda n, j: (0, 0))   # resident weight
    b_spec = pl.BlockSpec((C_out, 1), lambda n, j: (0, 0))      # resident bias

    out_isz = jnp.dtype(out_dtype).itemsize
    cost = pl.CostEstimate(
        flops=2 * 2 * N * P_pad * C_in * C_out,
        transcendentals=2 * N * P_pad,
        bytes_accessed=(2 * x0.size * x0.dtype.itemsize
                        + w.size * w.dtype.itemsize
                        + b.size * b.dtype.itemsize
                        + 2 * N * C_out * P_pad * out_isz),
    )

    out0, out1 = pl.pallas_call(
        _siamese_head_kernel,
        out_shape=(jax.ShapeDtypeStruct((N, C_out, P_pad), out_dtype),
                   jax.ShapeDtypeStruct((N, C_out, P_pad), out_dtype)),
        grid_spec=pltpu.PrefetchScalarGridSpec(
            num_scalar_prefetch=0,
            grid=grid,
            in_specs=[x_spec, x_spec, w_spec, b_spec],
            out_specs=[o_spec, o_spec],
        ),
        compiler_params=pltpu.CompilerParams(
            # Both grid axes independent -> megacore sharding on v7x; no-op on v5e/v6e.
            dimension_semantics=("parallel", "parallel"),
            vmem_limit_bytes=48 * 1024 * 1024,
        ),
        cost_estimate=cost,
    )(x0, x1, w, b)

    out0 = out0[:, :, :P].reshape(N, C_out, H, W)
    out1 = out1[:, :, :P].reshape(N, C_out, H, W)
    return out0, out1


class SiameseNetPallas:
    """Siamese head: shared (Dropout2d + Conv2d(C_in, C_out, 1)) + L2 norm on dim=1."""

    def __init__(self, c_in, c_out, key):
        k1, k2 = jax.random.split(key)
        # nn.Conv2d default init: U(-1/sqrt(fan_in), 1/sqrt(fan_in)), fan_in = c_in*1*1
        scale = 1.0 / jnp.sqrt(jnp.float32(c_in))
        w = jax.random.uniform(k1, (c_out, c_in), jnp.float32, -scale, scale)
        b = jax.random.uniform(k2, (c_out, 1), jnp.float32, -scale, scale)
        self.w = w.astype(jnp.bfloat16)   # bf16 weights; MXU accumulates in f32
        self.b = b                        # bias kept in f32

    def __call__(self, t0_feat, t1_feat):
        # TODO(synk): the dilated ResNet-101 backbone (BaseNet.base_forward producing
        # c4) is not reimplemented in Pallas; the kernel consumes c4-like NCHW maps.
        # Dropout2d(0.1, False) is identity in eval/forward-inference mode.
        out_t0, out_t1 = siamese_conv1x1_l2norm(t0_feat, t1_feat, self.w, self.b)
        return [out_t0, out_t1]


if __name__ == "__main__":
    # Small shapes consistent with the module: conv8 is 2048->512 on c4 features;
    # scaled down to C_in=256 -> C_out=128, batch=2, spatial=8x8.
    key = jax.random.PRNGKey(0)
    k0, k1, kp = jax.random.split(key, 3)
    N, C_IN, C_OUT, H, W = 2, 256, 128, 8, 8

    t0 = jax.random.normal(k0, (N, C_IN, H, W), jnp.float32)
    t1 = jax.random.normal(k1, (N, C_IN, H, W), jnp.float32)

    net = SiameseNetPallas(C_IN, C_OUT, kp)
    out0, out1 = net(t0, t1)
    jax.block_until_ready(out0)
    jax.block_until_ready(out1)

    assert out0.shape == (N, C_OUT, H, W) and out1.shape == (N, C_OUT, H, W)

    # Reference (same bf16 inputs/weights, f32 accumulation) for correctness.
    def ref(x):
        xb = x.astype(jnp.bfloat16)
        y = jnp.einsum("nchw,oc->nohw", xb, net.w,
                       preferred_element_type=jnp.float32)
        y = y + net.b.reshape(1, C_OUT, 1, 1)
        nrm = jnp.sqrt(jnp.sum(y * y, axis=1, keepdims=True))
        return y / jnp.maximum(nrm, 1e-12)

    r0, r1 = ref(t0), ref(t1)
    assert jnp.allclose(out0, r0, atol=2e-2, rtol=2e-2)
    assert jnp.allclose(out1, r1, atol=2e-2, rtol=2e-2)

    # Sanity: channel-wise L2 norms should be ~1 everywhere.
    n0 = jnp.sqrt(jnp.sum(out0 * out0, axis=1))
    n1 = jnp.sqrt(jnp.sum(out1 * out1, axis=1))
    assert jnp.allclose(n0, 1.0, atol=1e-3) and jnp.allclose(n1, 1.0, atol=1e-3)

    print("KERNEL_OK")
</pallas_src>

<mosaic_0001>
module attributes {stable_mosaic.version = 11 : i64} {
  func.func @_siamese_head_kernel(%arg0: i32, %arg1: i32, %arg2: memref<1x256x128xbf16, #tpu.memory_space<vmem>>, %arg3: memref<1x256x128xbf16, #tpu.memory_space<vmem>>, %arg4: memref<128x256xbf16, #tpu.memory_space<vmem>>, %arg5: memref<128x1xf32, #tpu.memory_space<vmem>>, %arg6: memref<1x128x128xf32, #tpu.memory_space<vmem>>, %arg7: memref<1x128x128xf32, #tpu.memory_space<vmem>>) attributes {dimension_semantics = [#tpu.dimension_semantics<parallel>, #tpu.dimension_semantics<parallel>], iteration_bounds = array<i64: 2, 1>, scalar_prefetch = 0 : i64, scratch_operands = 0 : i64, tpu.core_type = #tpu.core_type<tc>, window_params = [{transform_indices = @transform_0, window_bounds = array<i64: 1, 256, 128>}, {transform_indices = @transform_1, window_bounds = array<i64: 1, 256, 128>}, {pipeline_mode = #tpu.pipeline_mode<synchronous>, transform_indices = @transform_2, window_bounds = array<i64: 128, 256>}, {pipeline_mode = #tpu.pipeline_mode<synchronous>, transform_indices = @transform_3, window_bounds = array<i64: 128, 1>}, {transform_indices = @transform_4, window_bounds = array<i64: 1, 128, 128>}, {transform_indices = @transform_5, window_bounds = array<i64: 1, 128, 128>}]} {
    %c0 = arith.constant 0 : index
    %c0_0 = arith.constant 0 : index
    %0 = vector.load %arg4[%c0, %c0_0] : memref<128x256xbf16, #tpu.memory_space<vmem>>, vector<128x256xbf16>
    %c0_1 = arith.constant 0 : index
    %c0_2 = arith.constant 0 : index
    %1 = vector.load %arg5[%c0_1, %c0_2] : memref<128x1xf32, #tpu.memory_space<vmem>>, vector<128x1xf32>
    %c0_3 = arith.constant 0 : index
    %c0_4 = arith.constant 0 : index
    %c0_5 = arith.constant 0 : index
    %2 = vector.load %arg2[%c0_3, %c0_4, %c0_5] : memref<1x256x128xbf16, #tpu.memory_space<vmem>>, vector<1x256x128xbf16>
    %3 = vector.shape_cast %2 : vector<1x256x128xbf16> to vector<256x128xbf16>
    %cst = arith.constant dense<0.000000e+00> : vector<128x128xf32>
    %4 = tpu.matmul %0, %3, %cst {dimension_numbers = #tpu.dot_dimension_numbers<[1], [0], [0], [1], [0, 0, 1, 1], [], []>} : vector<128x256xbf16>, vector<256x128xbf16>, vector<128x128xf32> -> vector<128x128xf32>
    %5 = vector.broadcast %1 : vector<128x1xf32> to vector<128x128xf32>
    %6 = arith.addf %4, %5 : vector<128x128xf32>
    %7 = arith.mulf %6, %6 : vector<128x128xf32>
    %cst_6 = arith.constant dense<0.000000e+00> : vector<128xf32>
    %8 = vector.multi_reduction <add>, %7, %cst_6 [0] : vector<128x128xf32> to vector<128xf32>
    %9 = vector.shape_cast %8 : vector<128xf32> to vector<1x128xf32>
    %cst_7 = arith.constant 1.000000e-24 : f32
    %10 = vector.broadcast %cst_7 : f32 to vector<1x128xf32>
    %11 = arith.maximumf %9, %10 : vector<1x128xf32>
    %12 = math.rsqrt %11 : vector<1x128xf32>
    %13 = vector.broadcast %12 : vector<1x128xf32> to vector<128x128xf32>
    %14 = arith.mulf %6, %13 : vector<128x128xf32>
    %c0_8 = arith.constant 0 : index
    %c0_9 = arith.constant 0 : index
    %c0_10 = arith.constant 0 : index
    %15 = vector.load %arg6[%c0_8, %c0_9, %c0_10] : memref<1x128x128xf32, #tpu.memory_space<vmem>>, vector<1x128x128xf32>
    %16 = vector.shape_cast %15 : vector<1x128x128xf32> to vector<128x128xf32>
    %17 = vector.shape_cast %14 : vector<128x128xf32> to vector<1x128x128xf32>
    tpu.vector_store %arg6[%c0_8, %c0_9, %c0_10], %17 {strides = array<i32>} : memref<1x128x128xf32, #tpu.memory_space<vmem>>, vector<1x128x128xf32>,
    %c0_11 = arith.constant 0 : index
    %c0_12 = arith.constant 0 : index
    %c0_13 = arith.constant 0 : index
    %18 = vector.load %arg3[%c0_11, %c0_12, %c0_13] : memref<1x256x128xbf16, #tpu.memory_space<vmem>>, vector<1x256x128xbf16>
    %19 = vector.shape_cast %18 : vector<1x256x128xbf16> to vector<256x128xbf16>
    %cst_14 = arith.constant dense<0.000000e+00> : vector<128x128xf32>
    %20 = tpu.matmul %0, %19, %cst_14 {dimension_numbers = #tpu.dot_dimension_numbers<[1], [0], [0], [1], [0, 0, 1, 1], [], []>} : vector<128x256xbf16>, vector<256x128xbf16>, vector<128x128xf32> -> vector<128x128xf32>
    %21 = vector.broadcast %1 : vector<128x1xf32> to vector<128x128xf32>
    %22 = arith.addf %20, %21 : vector<128x128xf32>
    %23 = arith.mulf %22, %22 : vector<128x128xf32>
    %cst_15 = arith.constant dense<0.000000e+00> : vector<128xf32>
    %24 = vector.multi_reduction <add>, %23, %cst_15 [0] : vector<128x128xf32> to vector<128xf32>
    %25 = vector.shape_cast %24 : vector<128xf32> to vector<1x128xf32>
    %cst_16 = arith.constant 1.000000e-24 : f32
    %26 = vector.broadcast %cst_16 : f32 to vector<1x128xf32>
    %27 = arith.maximumf %25, %26 : vector<1x128xf32>
    %28 = math.rsqrt %27 : vector<1x128xf32>
    %29 = vector.broadcast %28 : vector<1x128xf32> to vector<128x128xf32>
    %30 = arith.mulf %22, %29 : vector<128x128xf32>
    %c0_17 = arith.constant 0 : index
    %c0_18 = arith.constant 0 : index
    %c0_19 = arith.constant 0 : index
    %31 = vector.load %arg7[%c0_17, %c0_18, %c0_19] : memref<1x128x128xf32, #tpu.memory_space<vmem>>, vector<1x128x128xf32>
    %32 = vector.shape_cast %31 : vector<1x128x128xf32> to vector<128x128xf32>
    %33 = vector.shape_cast %30 : vector<128x128xf32> to vector<1x128x128xf32>
    tpu.vector_store %arg7[%c0_17, %c0_18, %c0_19], %33 {strides = array<i32>} : memref<1x128x128xf32, #tpu.memory_space<vmem>>, vector<1x128x128xf32>,
    return
  }
  func.func @transform_0(%arg0: i32, %arg1: i32) -> (i32, i32, i32) {
    %c0_i32 = arith.constant 0 : i32
    %c0_i32_0 = arith.constant 0 : i32
    return %arg0, %c0_i32, %arg1 : i32, i32, i32
  }
  func.func @transform_1(%arg0: i32, %arg1: i32) -> (i32, i32, i32) {
    %c0_i32 = arith.constant 0 : i32
    %c0_i32_0 = arith.constant 0 : i32
    return %arg0, %c0_i32, %arg1 : i32, i32, i32
  }
  func.func @transform_2(%arg0: i32, %arg1: i32) -> (i32, i32) {
    %c0_i32 = arith.constant 0 : i32
    %c0_i32_0 = arith.constant 0 : i32
    %c0_i32_1 = arith.constant 0 : i32
    return %c0_i32, %c0_i32_0 : i32, i32
  }
  func.func @transform_3(%arg0: i32, %arg1: i32) -> (i32, i32) {
    %c0_i32 = arith.constant 0 : i32
    %c0_i32_0 = arith.constant 0 : i32
    %c0_i32_1 = arith.constant 0 : i32
    return %c0_i32, %c0_i32_0 : i32, i32
  }
  func.func @transform_4(%arg0: i32, %arg1: i32) -> (i32, i32, i32) {
    %c0_i32 = arith.constant 0 : i32
    %c0_i32_0 = arith.constant 0 : i32
    return %arg0, %c0_i32, %arg1 : i32, i32, i32
  }
  func.func @transform_5(%arg0: i32, %arg1: i32) -> (i32, i32, i32) {
    %c0_i32 = arith.constant 0 : i32
    %c0_i32_0 = arith.constant 0 : i32
    return %arg0, %c0_i32, %arg1 : i32, i32, i32
  }
}

</mosaic_0001>

<llo_original>
// kernel: tpu_custom_call.1
$region0: #{tpu_custom_call.1}
  #allocation0 [shape = 'u32[]', space=smem, size = 0x4, offset = 0x4, fixed_abs, tag = 'smem constant byte address 0x4 - core index']
  #allocation1 [shape = 'u32[144,128]{1,0:T(1,128)}', space=vmem, size = 0x12000, scoped, tag = 'internal scratch']
  %s0 = inlined_call_operand.hbm [shape: bf16[2,256,128], index: 0, kind: input, shape index: {}]
  %s1 = inlined_call_operand.hbm [shape: bf16[2,256,128], index: 1, kind: input, shape index: {}]
  %s2 = inlined_call_operand.vmem [shape: bf16[128,256], index: 2, kind: input, shape index: {}]
  %s3 = inlined_call_operand.vmem [shape: f32[128,1], index: 3, kind: input, shape index: {}]
  %s4 = inlined_call_operand.hbm [shape: f32[2,128,128], index: 4, kind: output, shape index: {0}]
  %s5 = inlined_call_operand.hbm [shape: f32[2,128,128], index: 5, kind: output, shape index: {1}]
  %6 = xla_tuple %s4, %s5
  %s7 = sld [smem:[#allocation0]]
  $region65: #{tpu_custom_call.1} parent=0
    _
  %s9 = ssub.s32 1, %s7
  %s10 = scalar_select 0, %s9, %s7
  $region1: #{tpu_custom_call.1} parent=0
    #allocation2 [shape = 'u8[131072]{0}', space=vmem, size = 0x20000, scoped, tag = 'input window, operand 0']
    #allocation3 [shape = 's32[2]{0}', space=sflag, size = 0x8, scoped, tag = 'scoped memory for tpu_custom_call.1']
    #allocation4 [shape = 's32[2]{0}', space=sflag, size = 0x8, scoped, tag = 'scoped memory for tpu_custom_call.1']
    #allocation5 [shape = 'u8[131072]{0}', space=vmem, size = 0x20000, scoped, tag = 'input window, operand 1']
    #allocation6 [shape = 's32[2]{0}', space=sflag, size = 0x8, scoped, tag = 'scoped memory for tpu_custom_call.1']
    #allocation7 [shape = 'u8[131072]{0}', space=vmem, size = 0x20000, scoped, tag = 'output window, operand 0']
    #allocation8 [shape = 'u8[131072]{0}', space=vmem, size = 0x20000, scoped, tag = 'output window, operand 1']
    #allocation9 [shape = 's32[2]{0}', space=sflag, size = 0x8, scoped, tag = 'scoped memory for tpu_custom_call.1']
    %11 = vsyncpa [#allocation3], 0
    %s12 = scalar_lea.sflag [#allocation3], 1
    %13 = vsyncpa %s12, 0
    %14 = vsyncpa [#allocation6], 0
    %s15 = scalar_lea.sflag [#allocation6], 1
    %16 = vsyncpa %s15, 0
    %17 = vsyncpa [#allocation4], 0
    %s18 = scalar_lea.sflag [#allocation4], 1
    %19 = vsyncpa %s18, 0
    %20 = vsyncpa [#allocation9], 0
    %s21 = scalar_lea.sflag [#allocation9], 1
    %22 = vsyncpa %s21, 0
    loop: start=0, step=1, limit=4
    $region2: #{tpu_custom_call.1} parent=1 // loop_pre_header
      _
    $region3: #{tpu_custom_call.1} parent=1 // loop_header
      %s24 = sphi 0, %s28
      %p25 = scmp.ge.s32.totalorder %s24, 4
      %s31 = sphi 0, %s43
      %s32 = sphi 0, %s39
      %s33 = sphi 0, %s31
      %s34 = sphi 0, %s32
      %s35 = sphi 0, %s33
      %s36 = sphi 0, %s34
      %s48 = sphi 0, %s50
      %s51 = sphi 0, %s48
      %s52 = sphi 0, %s51
      %s68 = sphi 0, %s52
      %s76 = sphi 0, %s78
      %s79 = sphi 0, %s76
      %s80 = sphi 0, %s79
      %s96 = sphi 0, %s80
      %s100 = sphi 0, %s100
      %s102 = sphi 0, %s100
      %s103 = sphi 0, %s102
      %s117 = sphi 0, %s103
      %s121 = sphi 0, %s121
      %s123 = sphi 0, %s121
      %s124 = sphi 0, %s123
      %s138 = sphi 0, %s124
      %s146 = sphi 0, %s148
      %s149 = sphi 0, %s146
      %s150 = sphi 0, %s149
      %s166 = sphi 0, %s150
      %s174 = sphi 0, %s176
      %s177 = sphi 0, %s174
      %s178 = sphi 0, %s177
      %s194 = sphi 0, %s178
    $region4: #{tpu_custom_call.1} parent=1 // loop_header_branch
      %27 = sbr.rel (%p25) target = $region8
    $region5: #{tpu_custom_call.1} parent=1 // loop_body
      %s29 = ssub.s32 %s24, 1
      %s30 = ssub.s32 %s24, 2
      %s37 = sadd.s32 1, %s32
      %p38 = scmp.ge.s32.totalorder %s37, 1
      %s39 = scalar_select %p38, 0, %s37
      %s40 = sadd.s32 1, %s31
      %s41 = scalar_select %p38, %s40, %s31
      %p42 = scmp.ge.s32.totalorder %s41, 2
      %s43 = scalar_select %p42, 0, %s41
      %s44 = ssub.s32 %s31, %s43
      %s45 = ssub.s32 %s32, %s39
      %s46 = sor.u32 %s44, %s45
      %p47 = scmp.eq.s32.totalorder %s46, 0
      %s49 = sadd.s32 %s48, 1
      %s50 = scalar_select %p47, %s48, %s49
      %p53 = pneg %p47
      %p54 = scmp.eq.s32.totalorder %s24, 1
      %p55 = por %p53, %p54
      %p56 = scmp.ne.s32.totalorder %s48, %s51
      %p57 = scmp.eq.s32.totalorder %s24, 0
      %p58 = por %p56, %p57
      %p59 = scmp.ne.s32.totalorder %s48, %s51
      %p60 = scmp.eq.s32.totalorder %s29, 1
      %p61 = por %p59, %p60
      %p62 = scmp.ne.s32.totalorder %s51, %s52
      %p63 = scmp.eq.s32.totalorder %s29, 0
      %p64 = por %p62, %p63
      %p65 = scmp.ne.s32.totalorder %s51, %s52
      %p66 = scmp.eq.s32.totalorder %s30, 1
      %p67 = por %p65, %p66
      %p69 = scmp.ne.s32.totalorder %s52, %s68
      %p70 = scmp.eq.s32.totalorder %s30, 0
      %p71 = por %p69, %p70
      %s72 = ssub.s32 %s31, %s43
      %s73 = ssub.s32 %s32, %s39
      %s74 = sor.u32 %s72, %s73
      %p75 = scmp.eq.s32.totalorder %s74, 0
      %s77 = sadd.s32 %s76, 1
      %s78 = scalar_select %p75, %s76, %s77
      %p81 = pneg %p75
      %p82 = scmp.eq.s32.totalorder %s24, 1
      %p83 = por %p81, %p82
      %p84 = scmp.ne.s32.totalorder %s76, %s79
      %p85 = scmp.eq.s32.totalorder %s24, 0
      %p86 = por %p84, %p85
      %p87 = scmp.ne.s32.totalorder %s76, %s79
      %p88 = scmp.eq.s32.totalorder %s29, 1
      %p89 = por %p87, %p88
      %p90 = scmp.ne.s32.totalorder %s79, %s80
      %p91 = scmp.eq.s32.totalorder %s29, 0
      %p92 = por %p90, %p91
      %p93 = scmp.ne.s32.totalorder %s79, %s80
      %p94 = scmp.eq.s32.totalorder %s30, 1
      %p95 = por %p93, %p94
      %p97 = scmp.ne.s32.totalorder %s80, %s96
      %p98 = scmp.eq.s32.totalorder %s30, 0
      %p99 = por %p97, %p98
      %s101 = sadd.s32 %s100, 1
      %p104 = scmp.eq.s32.totalorder %s24, 1
      %p105 = scmp.ne.s32.totalorder %s100, %s102
      %p106 = scmp.eq.s32.totalorder %s24, 0
      %p107 = por %p105, %p106
      %p108 = scmp.ne.s32.totalorder %s100, %s102
      %p109 = scmp.eq.s32.totalorder %s29, 1
      %p110 = por %p108, %p109
      %p111 = scmp.ne.s32.totalorder %s102, %s103
      %p112 = scmp.eq.s32.totalorder %s29, 0
      %p113 = por %p111, %p112
      %p114 = scmp.ne.s32.totalorder %s102, %s103
      %p115 = scmp.eq.s32.totalorder %s30, 1
      %p116 = por %p114, %p115
      %p118 = scmp.ne.s32.totalorder %s103, %s117
      %p119 = scmp.eq.s32.totalorder %s30, 0
      %p120 = por %p118, %p119
      %s122 = sadd.s32 %s121, 1
      %p125 = scmp.eq.s32.totalorder %s24, 1
      %p126 = scmp.ne.s32.totalorder %s121, %s123
      %p127 = scmp.eq.s32.totalorder %s24, 0
      %p128 = por %p126, %p127
      %p129 = scmp.ne.s32.totalorder %s121, %s123
      %p130 = scmp.eq.s32.totalorder %s29, 1
      %p131 = por %p129, %p130
      %p132 = scmp.ne.s32.totalorder %s123, %s124
      %p133 = scmp.eq.s32.totalorder %s29, 0
      %p134 = por %p132, %p133
      %p135 = scmp.ne.s32.totalorder %s123, %s124
      %p136 = scmp.eq.s32.totalorder %s30, 1
      %p137 = por %p135, %p136
      %p139 = scmp.ne.s32.totalorder %s124, %s138
      %p140 = scmp.eq.s32.totalorder %s30, 0
      %p141 = por %p139, %p140
      %s142 = ssub.s32 %s31, %s43
      %s143 = ssub.s32 %s32, %s39
      %s144 = sor.u32 %s142, %s143
      %p145 = scmp.eq.s32.totalorder %s144, 0
      %s147 = sadd.s32 %s146, 1
      %s148 = scalar_select %p145, %s146, %s147
      %p151 = pneg %p145
      %p152 = scmp.eq.s32.totalorder %s24, 1
      %p153 = por %p151, %p152
      %p154 = scmp.ne.s32.totalorder %s146, %s149
      %p155 = scmp.eq.s32.totalorder %s24, 0
      %p156 = por %p154, %p155
      %p157 = scmp.ne.s32.totalorder %s146, %s149
      %p158 = scmp.eq.s32.totalorder %s29, 1
      %p159 = por %p157, %p158
      %p160 = scmp.ne.s32.totalorder %s149, %s150
      %p161 = scmp.eq.s32.totalorder %s29, 0
      %p162 = por %p160, %p161
      %p163 = scmp.ne.s32.totalorder %s149, %s150
      %p164 = scmp.eq.s32.totalorder %s30, 1
      %p165 = por %p163, %p164
      %p167 = scmp.ne.s32.totalorder %s150, %s166
      %p168 = scmp.eq.s32.totalorder %s30, 0
      %p169 = por %p167, %p168
      %s170 = ssub.s32 %s31, %s43
      %s171 = ssub.s32 %s32, %s39
      %s172 = sor.u32 %s170, %s171
      %p173 = scmp.eq.s32.totalorder %s172, 0
      %s175 = sadd.s32 %s174, 1
      %s176 = scalar_select %p173, %s174, %s175
      %p179 = pneg %p173
      %p180 = scmp.eq.s32.totalorder %s24, 1
      %p181 = por %p179, %p180
      %p182 = scmp.ne.s32.totalorder %s174, %s177
      %p183 = scmp.eq.s32.totalorder %s24, 0
      %p184 = por %p182, %p183
      %p185 = scmp.ne.s32.totalorder %s174, %s177
      %p186 = scmp.eq.s32.totalorder %s29, 1
      %p187 = por %p185, %p186
      %p188 = scmp.ne.s32.totalorder %s177, %s178
      %p189 = scmp.eq.s32.totalorder %s29, 0
      %p190 = por %p188, %p189
      %p191 = scmp.ne.s32.totalorder %s177, %s178
      %p192 = scmp.eq.s32.totalorder %s30, 1
      %p193 = por %p191, %p192
      %p195 = scmp.ne.s32.totalorder %s178, %s194
      %p196 = scmp.eq.s32.totalorder %s30, 0
      %p197 = por %p195, %p196
      %p198 = scmp.le.s32.totalorder 1, %s24
      %p199 = scmp.lt.s32.totalorder %s24, 3
      %p200 = pnand %p198, %p199
      %p201 = pneg %p200
      // Predicated region
      $region9: #{tpu_custom_call.1} parent=5 // pred_check
        _
      $region10: #{tpu_custom_call.1} parent=5 // pred_check_branch
        %203 = sbr.rel (%p200) target = $region12
      $region11: #{tpu_custom_call.1} parent=5 // pred_region
        %s204 = ssub.s32 %s24, 1
        // Predicated region
        $region13: #{tpu_custom_call.1} parent=11 // pred_check
          %p205 = pneg %p113
        $region14: #{tpu_custom_call.1} parent=11 // pred_check_branch
          %207 = sbr.rel (%p205) target = $region16
        $region15: #{tpu_custom_call.1} parent=11 // pred_region
          _
        $region16: #{tpu_custom_call.1} parent=11 // pred_fallthru
          _
        // Predicated region
        $region17: #{tpu_custom_call.1} parent=11 // pred_check
          %p208 = pneg %p134
        $region18: #{tpu_custom_call.1} parent=11 // pred_check_branch
          %210 = sbr.rel (%p208) target = $region20
        $region19: #{tpu_custom_call.1} parent=11 // pred_region
          _
        $region20: #{tpu_custom_call.1} parent=11 // pred_fallthru
          _
      $region12: #{tpu_custom_call.1} parent=5 // pred_fallthru
        _
      %p211 = scmp.lt.s32.totalorder %s24, 2
      // Predicated region
      $region21: #{tpu_custom_call.1} parent=5 // pred_check
        %p212 = pneg %p211
      $region22: #{tpu_custom_call.1} parent=5 // pred_check_branch
        %214 = sbr.rel (%p212) target = $region24
      $region23: #{tpu_custom_call.1} parent=5 // pred_region
        // Predicated region
        $region25: #{tpu_custom_call.1} parent=23 // pred_check
          %p215 = pneg %p58
        $region26: #{tpu_custom_call.1} parent=23 // pred_check_branch
          %217 = sbr.rel (%p215) target = $region28
        $region27: #{tpu_custom_call.1} parent=23 // pred_region
          %s218 = sand.u32 %s48, 1
          %s219 = scalar_lea.sflag [#allocation3], %s218
          %s220 = sand.u32 %s48, 1
          %s221 = smul.addr %s220, 128
          %s222 = scalar_lea.vmem [#allocation2], %s221
          %s224 = ssub.s32 2048, 2048
          %225 = vsyncadd %s219, %s224
          %s226 = smul.addr %s31, 32
          %s227 = sadd.s32 %s32, %s226
          %s228 = smul.addr %s227, 64
          %s229 = scalar_lea.hbm %s0, %s228
          %s230 = sshll.u32 %s222, 4
          %s231 = int_to_ptr.vmem [resolvable:$true] %s230
          %236 = dma.hbm_to_vmem [thread:$0]  %s229, 2048, %s231, %s219, 64, 64, 4
        $region28: #{tpu_custom_call.1} parent=23 // pred_fallthru
          _
        // Predicated region
        $region29: #{tpu_custom_call.1} parent=23 // pred_check
          %p237 = pneg %p86
        $region30: #{tpu_custom_call.1} parent=23 // pred_check_branch
          %239 = sbr.rel (%p237) target = $region32
        $region31: #{tpu_custom_call.1} parent=23 // pred_region
          %s240 = sand.u32 %s76, 1
          %s241 = scalar_lea.sflag [#allocation6], %s240
          %s242 = sand.u32 %s76, 1
          %s243 = smul.addr %s242, 128
          %s244 = scalar_lea.vmem [#allocation5], %s243
          %s246 = ssub.s32 2048, 2048
          %247 = vsyncadd %s241, %s246
          %s248 = smul.addr %s31, 32
          %s249 = sadd.s32 %s32, %s248
          %s250 = smul.addr %s249, 64
          %s251 = scalar_lea.hbm %s1, %s250
          %s252 = sshll.u32 %s244, 4
          %s253 = int_to_ptr.vmem [resolvable:$true] %s252
          %258 = dma.hbm_to_vmem [thread:$0]  %s251, 2048, %s253, %s241, 64, 64, 4
        $region32: #{tpu_custom_call.1} parent=23 // pred_fallthru
          _
      $region24: #{tpu_custom_call.1} parent=5 // pred_fallthru
        _
      %p259 = scmp.le.s32.totalorder 1, %s24
      %p260 = scmp.lt.s32.totalorder %s24, 3
      %p261 = pnand %p259, %p260
      %p262 = pneg %p261
      // Predicated region
      $region33: #{tpu_custom_call.1} parent=5 // pred_check
        _
      $region34: #{tpu_custom_call.1} parent=5 // pred_check_branch
        %264 = sbr.rel (%p261) target = $region36
      $region35: #{tpu_custom_call.1} parent=5 // pred_region
        %s265 = ssub.s32 %s24, 1
        %s266 = sand.u32 %s51, 1
        %s267 = scalar_lea.sflag [#allocation3], %s266
        %s268 = sand.u32 %s51, 1
        %s269 = smul.addr %s268, 128
        %s270 = scalar_lea.vmem [#allocation2], %s269
        // Predicated region
        $region37: #{tpu_custom_call.1} parent=35 // pred_check
          %p271 = pneg %p64
        $region38: #{tpu_custom_call.1} parent=35 // pred_check_branch
          %273 = sbr.rel (%p271) target = $region40
        $region39: #{tpu_custom_call.1} parent=35 // pred_region
          %274 = dma.done %s267, 2048
        $region40: #{tpu_custom_call.1} parent=35 // pred_fallthru
          _
        %s275 = sand.u32 %s79, 1
        %s276 = scalar_lea.sflag [#allocation6], %s275
        %s277 = sand.u32 %s79, 1
        %s278 = smul.addr %s277, 128
        %s279 = scalar_lea.vmem [#allocation5], %s278
        // Predicated region
        $region41: #{tpu_custom_call.1} parent=35 // pred_check
          %p280 = pneg %p92
        $region42: #{tpu_custom_call.1} parent=35 // pred_check_branch
          %282 = sbr.rel (%p280) target = $region44
        $region43: #{tpu_custom_call.1} parent=35 // pred_region
          %283 = dma.done %s276, 2048
        $region44: #{tpu_custom_call.1} parent=35 // pred_fallthru
          _
        %s284 = sand.u32 %s51, 1
        %s285 = scalar_lea.sflag [#allocation3], %s284
        %s286 = sand.u32 %s51, 1
        %s287 = smul.addr %s286, 128
        %s288 = scalar_lea.vmem [#allocation2], %s287
        %p289 = pneg %p64
        %p290 = pneg %p61
        %s291 = sand.u32 %s79, 1
        %s292 = scalar_lea.sflag [#allocation6], %s291
        %s293 = sand.u32 %s79, 1
        %s294 = smul.addr %s293, 128
        %s295 = scalar_lea.vmem [#allocation5], %s294
        %p296 = pneg %p92
        %p297 = pneg %p89
        %p298 = pneg %p113
        %p299 = pneg %p110
        %p300 = pneg %p134
        %p301 = pneg %p131
        %p302 = pneg %p162
        %p303 = pneg %p159
        %s304 = sand.u32 %s149, 1
        %s305 = scalar_lea.sflag [#allocation4], %s304
        %s306 = sand.u32 %s149, 1
        %s307 = smul.addr %s306, 128
        %s308 = scalar_lea.vmem [#allocation7], %s307
        %p309 = pneg %p190
        %p310 = pneg %p187
        %s311 = sand.u32 %s177, 1
        %s312 = scalar_lea.sflag [#allocation9], %s311
        %s313 = sand.u32 %s177, 1
        %s314 = smul.addr %s313, 128
        %s315 = scalar_lea.vmem [#allocation8], %s314
        %v317 = vld [vmem:[%s2] sm:$0xff]
        %v318 = vld [vmem:[%s2 + $0x8] sm:$0xff]
        %v319 = vld [vmem:[%s2 + $0x10] sm:$0xff]
        %v320 = vld [vmem:[%s2 + $0x18] sm:$0xff]
        %v321 = vld [vmem:[%s2 + $0x20] sm:$0xff]
        %v322 = vld [vmem:[%s2 + $0x28] sm:$0xff]
        %v323 = vld [vmem:[%s2 + $0x30] sm:$0xff]
        %v324 = vld [vmem:[%s2 + $0x38] sm:$0xff]
        %v325 = vld [vmem:[%s2 + $0x40] sm:$0xff]
        %v326 = vld [vmem:[%s2 + $0x48] sm:$0xff]
        %v327 = vld [vmem:[%s2 + $0x50] sm:$0xff]
        %v328 = vld [vmem:[%s2 + $0x58] sm:$0xff]
        %v329 = vld [vmem:[%s2 + $0x60] sm:$0xff]
        %v330 = vld [vmem:[%s2 + $0x68] sm:$0xff]
        %v331 = vld [vmem:[%s2 + $0x70] sm:$0xff]
        %v332 = vld [vmem:[%s2 + $0x78] sm:$0xff]
        %v333 = vld [vmem:[%s3] sm:$0xff]
        %v334 = vld [vmem:[%s3 + $0x8] sm:$0xff]
        %v335 = vld [vmem:[%s3 + $0x10] sm:$0xff]
        %v336 = vld [vmem:[%s3 + $0x18] sm:$0xff]
        %v337 = vld [vmem:[%s3 + $0x20] sm:$0xff]
        %v338 = vld [vmem:[%s3 + $0x28] sm:$0xff]
        %v339 = vld [vmem:[%s3 + $0x30] sm:$0xff]
        %v340 = vld [vmem:[%s3 + $0x38] sm:$0xff]
        %v341 = vld [vmem:[%s3 + $0x40] sm:$0xff]
        %v342 = vld [vmem:[%s3 + $0x48] sm:$0xff]
        %v343 = vld [vmem:[%s3 + $0x50] sm:$0xff]
        %v344 = vld [vmem:[%s3 + $0x58] sm:$0xff]
        %v345 = vld [vmem:[%s3 + $0x60] sm:$0xff]
        %v346 = vld [vmem:[%s3 + $0x68] sm:$0xff]
        %v347 = vld [vmem:[%s3 + $0x70] sm:$0xff]
        %v348 = vld [vmem:[%s3 + $0x78] sm:$0xff]
        %v349 = vld [vmem:[%s270] sm:$0xf]
        %v350 = vld [vmem:[%s270 + $0x4] sm:$0xf]
        %v351 = vld [vmem:[%s270 + $0x8] sm:$0xf]
        %v352 = vld [vmem:[%s270 + $0xc] sm:$0xf]
        %v353 = vld [vmem:[%s270 + $0x10] sm:$0xf]
        %v354 = vld [vmem:[%s270 + $0x14] sm:$0xf]
        %v355 = vld [vmem:[%s270 + $0x18] sm:$0xf]
        %v356 = vld [vmem:[%s270 + $0x1c] sm:$0xf]
        %v357 = vld [vmem:[%s270 + $0x20] sm:$0xf]
        %v358 = vld [vmem:[%s270 + $0x24] sm:$0xf]
        %v359 = vld [vmem:[%s270 + $0x28] sm:$0xf]
        %v360 = vld [vmem:[%s270 + $0x2c] sm:$0xf]
        %v361 = vld [vmem:[%s270 + $0x30] sm:$0xf]
        %v362 = vld [vmem:[%s270 + $0x34] sm:$0xf]
        %v363 = vld [vmem:[%s270 + $0x38] sm:$0xf]
        %v364 = vld [vmem:[%s270 + $0x3c] sm:$0xf]
        %v365 = vld [vmem:[%s270 + $0x40] sm:$0xf]
        %v366 = vld [vmem:[%s270 + $0x44] sm:$0xf]
        %v367 = vld [vmem:[%s270 + $0x48] sm:$0xf]
        %v368 = vld [vmem:[%s270 + $0x4c] sm:$0xf]
        %v369 = vld [vmem:[%s270 + $0x50] sm:$0xf]
        %v370 = vld [vmem:[%s270 + $0x54] sm:$0xf]
        %v371 = vld [vmem:[%s270 + $0x58] sm:$0xf]
        %v372 = vld [vmem:[%s270 + $0x5c] sm:$0xf]
        %v373 = vld [vmem:[%s270 + $0x60] sm:$0xf]
        %v374 = vld [vmem:[%s270 + $0x64] sm:$0xf]
        %v375 = vld [vmem:[%s270 + $0x68] sm:$0xf]
        %v376 = vld [vmem:[%s270 + $0x6c] sm:$0xf]
        %v377 = vld [vmem:[%s270 + $0x70] sm:$0xf]
        %v378 = vld [vmem:[%s270 + $0x74] sm:$0xf]
        %v379 = vld [vmem:[%s270 + $0x78] sm:$0xf]
        %v380 = vld [vmem:[%s270 + $0x7c] sm:$0xf]
        %382 = vset.pattern.permute.xlu0 0
        %383 = vperm.xlu0 %382, %v333
        %v384 = vpop.permute.xlu0 %383
        %387 = vset.pattern.permute.xlu0 0
        %388 = vperm.xlu0 %387, %v334
        %v389 = vpop.permute.xlu0 %388
        %392 = vset.pattern.permute.xlu0 0
        %393 = vperm.xlu0 %392, %v335
        %v394 = vpop.permute.xlu0 %393
        %397 = vset.pattern.permute.xlu0 0
        %398 = vperm.xlu0 %397, %v336
        %v399 = vpop.permute.xlu0 %398
        %402 = vset.pattern.permute.xlu0 0
        %403 = vperm.xlu0 %402, %v337
        %v404 = vpop.permute.xlu0 %403
        %407 = vset.pattern.permute.xlu0 0
        %408 = vperm.xlu0 %407, %v338
        %v409 = vpop.permute.xlu0 %408
        %412 = vset.pattern.permute.xlu0 0
        %413 = vperm.xlu0 %412, %v339
        %v414 = vpop.permute.xlu0 %413
        %417 = vset.pattern.permute.xlu0 0
        %418 = vperm.xlu0 %417, %v340
        %v419 = vpop.permute.xlu0 %418
        %422 = vset.pattern.permute.xlu0 0
        %423 = vperm.xlu0 %422, %v341
        %v424 = vpop.permute.xlu0 %423
        %427 = vset.pattern.permute.xlu0 0
        %428 = vperm.xlu0 %427, %v342
        %v429 = vpop.permute.xlu0 %428
        %432 = vset.pattern.permute.xlu0 0
        %433 = vperm.xlu0 %432, %v343
        %v434 = vpop.permute.xlu0 %433
        %437 = vset.pattern.permute.xlu0 0
        %438 = vperm.xlu0 %437, %v344
        %v439 = vpop.permute.xlu0 %438
        %442 = vset.pattern.permute.xlu0 0
        %443 = vperm.xlu0 %442, %v345
        %v444 = vpop.permute.xlu0 %443
        %447 = vset.pattern.permute.xlu0 0
        %448 = vperm.xlu0 %447, %v346
        %v449 = vpop.permute.xlu0 %448
        %452 = vset.pattern.permute.xlu0 0
        %453 = vperm.xlu0 %452, %v347
        %v454 = vpop.permute.xlu0 %453
        %457 = vset.pattern.permute.xlu0 0
        %458 = vperm.xlu0 %457, %v348
        %v459 = vpop.permute.xlu0 %458
        %v477 = vunpack.c.l.b16 %v317
        %v478 = vunpack.c.h.b16 %v317
        %v479 = vunpack.c.l.b16 %v318
        %v480 = vunpack.c.h.b16 %v318
        %v481 = vunpack.c.l.b16 %v319
        %v482 = vunpack.c.h.b16 %v319
        %v483 = vunpack.c.l.b16 %v320
        %v484 = vunpack.c.h.b16 %v320
        %v485 = vunpack.c.l.b16 %v321
        %v486 = vunpack.c.h.b16 %v321
        %v487 = vunpack.c.l.b16 %v322
        %v488 = vunpack.c.h.b16 %v322
        %v489 = vunpack.c.l.b16 %v323
        %v490 = vunpack.c.h.b16 %v323
        %v491 = vunpack.c.l.b16 %v324
        %v492 = vunpack.c.h.b16 %v324
        %v493 = vunpack.c.l.b16 %v325
        %v494 = vunpack.c.h.b16 %v325
        %v495 = vunpack.c.l.b16 %v326
        %v496 = vunpack.c.h.b16 %v326
        %v497 = vunpack.c.l.b16 %v327
        %v498 = vunpack.c.h.b16 %v327
        %v499 = vunpack.c.l.b16 %v328
        %v500 = vunpack.c.h.b16 %v328
        %v501 = vunpack.c.l.b16 %v329
        %v502 = vunpack.c.h.b16 %v329
        %v503 = vunpack.c.l.b16 %v330
        %v504 = vunpack.c.h.b16 %v330
        %v505 = vunpack.c.l.b16 %v331
        %v506 = vunpack.c.h.b16 %v331
        %v507 = vunpack.c.l.b16 %v332
        %v508 = vunpack.c.h.b16 %v332
        %v509 = vpack.c.b16 %v479, %v477
        %v510 = vpack.c.b16 %v480, %v478
        %v511 = vpack.c.b16 %v483, %v481
        %v512 = vpack.c.b16 %v484, %v482
        %v513 = vpack.c.b16 %v487, %v485
        %v514 = vpack.c.b16 %v488, %v486
        %v515 = vpack.c.b16 %v491, %v489
        %v516 = vpack.c.b16 %v492, %v490
        %v517 = vpack.c.b16 %v495, %v493
        %v518 = vpack.c.b16 %v496, %v494
        %v519 = vpack.c.b16 %v499, %v497
        %v520 = vpack.c.b16 %v500, %v498
        %v521 = vpack.c.b16 %v503, %v501
        %v522 = vpack.c.b16 %v504, %v502
        %v523 = vpack.c.b16 %v507, %v505
        %v524 = vpack.c.b16 %v508, %v506
        %v573 = vunpack.c.l.b16 %v349
        %v574 = vunpack.c.l.b16 %v350
        %v575 = vunpack.c.l.b16 %v351
        %v576 = vunpack.c.l.b16 %v352
        %v577 = vunpack.c.l.b16 %v353
        %v578 = vunpack.c.l.b16 %v354
        %v579 = vunpack.c.l.b16 %v355
        %v580 = vunpack.c.l.b16 %v356
        %v581 = vunpack.c.l.b16 %v357
        %v582 = vunpack.c.l.b16 %v358
        %v583 = vunpack.c.l.b16 %v359
        %v584 = vunpack.c.l.b16 %v360
        %v585 = vunpack.c.l.b16 %v361
        %v586 = vunpack.c.l.b16 %v362
        %v587 = vunpack.c.l.b16 %v363
        %v588 = vunpack.c.l.b16 %v364
        %v589 = vunpack.c.l.b16 %v365
        %v590 = vunpack.c.l.b16 %v366
        %v591 = vunpack.c.l.b16 %v367
        %v592 = vunpack.c.l.b16 %v368
        %v593 = vunpack.c.l.b16 %v369
        %v594 = vunpack.c.l.b16 %v370
        %v595 = vunpack.c.l.b16 %v371
        %v596 = vunpack.c.l.b16 %v372
        %v597 = vunpack.c.l.b16 %v373
        %v598 = vunpack.c.l.b16 %v374
        %v599 = vunpack.c.l.b16 %v375
        %v600 = vunpack.c.l.b16 %v376
        %v601 = vunpack.c.l.b16 %v377
        %v602 = vunpack.c.l.b16 %v378
        %v603 = vunpack.c.l.b16 %v379
        %v604 = vunpack.c.l.b16 %v380
        %v605 = vpack.c.b16 %v574, %v573
        %v606 = vpack.c.b16 %v576, %v575
        %v607 = vpack.c.b16 %v578, %v577
        %v608 = vpack.c.b16 %v580, %v579
        %v609 = vpack.c.b16 %v582, %v581
        %v610 = vpack.c.b16 %v584, %v583
        %v611 = vpack.c.b16 %v586, %v585
        %v612 = vpack.c.b16 %v588, %v587
        %v613 = vpack.c.b16 %v590, %v589
        %v614 = vpack.c.b16 %v592, %v591
        %v615 = vpack.c.b16 %v594, %v593
        %v616 = vpack.c.b16 %v596, %v595
        %v617 = vpack.c.b16 %v598, %v597
        %v618 = vpack.c.b16 %v600, %v599
        %v619 = vpack.c.b16 %v602, %v601
        %v620 = vpack.c.b16 %v604, %v603
        %637 = vmatprep.subr.bf16.mxu0 0
        %638 = vmatpush1.bf16.msra.mxu0 %v612
        %639 = vmatprep.subr.bf16.mxu0 0
        %640 = vmatpush1.bf16.msra.mxu0 %v611
        %641 = vmatprep.subr.bf16.mxu0 0
        %642 = vmatpush1.bf16.msra.mxu0 %v610
        %643 = vmatprep.subr.bf16.mxu0 0
        %644 = vmatpush1.bf16.msra.mxu0 %v609
        %645 = vmatprep.subr.bf16.mxu0 0
        %646 = vmatpush1.bf16.msra.mxu0 %v608
        %647 = vmatprep.subr.bf16.mxu0 0
        %648 = vmatpush1.bf16.msra.mxu0 %v607
        %649 = vmatprep.subr.bf16.mxu0 0
        %650 = vmatpush1.bf16.msra.mxu0 %v606
        %651 = vmatprep.subr.bf16.mxu0 0
        %652 = vmatpush1.bf16.msra.mxu0 %v605
        %653 = vmatprep.subr.bf16.mxu0 0
        %654 = vmatpush2.bf16.msra.mxu0 %v620
        %655 = vmatprep.subr.bf16.mxu0 0
        %656 = vmatpush2.bf16.msra.mxu0 %v619
        %657 = vmatprep.subr.bf16.mxu0 0
        %658 = vmatpush2.bf16.msra.mxu0 %v618
        %659 = vmatprep.subr.bf16.mxu0 0
        %660 = vmatpush2.bf16.msra.mxu0 %v617
        %661 = vmatprep.subr.bf16.mxu0 0
        %662 = vmatpush2.bf16.msra.mxu0 %v616
        %663 = vmatprep.subr.bf16.mxu0 0
        %664 = vmatpush2.bf16.msra.mxu0 %v615
        %665 = vmatprep.subr.bf16.mxu0 0
        %666 = vmatpush2.bf16.msra.mxu0 %v614
        %667 = vmatprep.subr.bf16.mxu0 0
        %668 = vmatpush2.bf16.msra.mxu0 %v613
        %669 = vmatprep.mubr.bf16.mxu0 %v510
        %670 = vmatmul.mubr.bf16.gmra.mxu0 %v509
        %v671 = vpop.f32.mrf.mxu0
        %v672 = vadd.f32 %v384, %v671
        %v673 = vpop.f32.mrf.mxu0
        %v674 = vpop.f32.mrf.mxu0
        %v675 = vadd.f32 %v389, %v674
        %v676 = vpop.f32.mrf.mxu0
        %677 = vmatprep.mubr.bf16.mxu0 %v512
        %678 = vmatmul.mubr.bf16.gmra.mxu0 %v511
        %v679 = vpop.f32.mrf.mxu0
        %v680 = vadd.f32 %v394, %v679
        %v681 = vpop.f32.mrf.mxu0
        %v682 = vpop.f32.mrf.mxu0
        %v683 = vadd.f32 %v399, %v682
        %v684 = vpop.f32.mrf.mxu0
        %685 = vmatprep.mubr.bf16.mxu0 %v514
        %686 = vmatmul.mubr.bf16.gmra.mxu0 %v513
        %v687 = vpop.f32.mrf.mxu0
        %v688 = vadd.f32 %v404, %v687
        %v689 = vpop.f32.mrf.mxu0
        %v690 = vpop.f32.mrf.mxu0
        %v691 = vadd.f32 %v409, %v690
        %v692 = vpop.f32.mrf.mxu0
        %693 = vmatprep.mubr.bf16.mxu0 %v516
        %694 = vmatmul.mubr.bf16.gmra.mxu0 %v515
        %v695 = vpop.f32.mrf.mxu0
        %v696 = vadd.f32 %v414, %v695
        %v697 = vpop.f32.mrf.mxu0
        %v698 = vpop.f32.mrf.mxu0
        %v699 = vadd.f32 %v419, %v698
        %v700 = vpop.f32.mrf.mxu0
        %701 = vmatprep.mubr.bf16.mxu0 %v518
        %702 = vmatmul.mubr.bf16.gmra.mxu0 %v517
        %v703 = vpop.f32.mrf.mxu0
        %v704 = vadd.f32 %v424, %v703
        %v705 = vpop.f32.mrf.mxu0
        %v706 = vpop.f32.mrf.mxu0
        %v707 = vadd.f32 %v429, %v706
        %v708 = vpop.f32.mrf.mxu0
        %709 = vmatprep.mubr.bf16.mxu0 %v520
        %710 = vmatmul.mubr.bf16.gmra.mxu0 %v519
        %v711 = vpop.f32.mrf.mxu0
        %v712 = vadd.f32 %v434, %v711
        %v713 = vpop.f32.mrf.mxu0
        %v714 = vpop.f32.mrf.mxu0
        %v715 = vadd.f32 %v439, %v714
        %v716 = vpop.f32.mrf.mxu0
        %717 = vmatprep.mubr.bf16.mxu0 %v522
        %718 = vmatmul.mubr.bf16.gmra.mxu0 %v521
        %v719 = vpop.f32.mrf.mxu0
        %v720 = vadd.f32 %v444, %v719
        %v721 = vpop.f32.mrf.mxu0
        %v722 = vpop.f32.mrf.mxu0
        %v723 = vadd.f32 %v449, %v722
        %v724 = vpop.f32.mrf.mxu0
        %725 = vmatprep.mubr.bf16.mxu0 %v524
        %726 = vmatmul.mubr.bf16.gmra.mxu0 %v523
        %v727 = vpop.f32.mrf.mxu0
        %v728 = vadd.f32 %v454, %v727
        %v729 = vpop.f32.mrf.mxu0
        %v730 = vpop.f32.mrf.mxu0
        %v731 = vadd.f32 %v459, %v730
        %v732 = vpop.f32.mrf.mxu0
        %733 = vdwg.mxu0
        %v734 = vmul.f32 %v672, %v672
        %v735 = vmul.f32 %v675, %v675
        %v736 = vmul.f32 %v680, %v680
        %v737 = vmul.f32 %v683, %v683
        %v738 = vmul.f32 %v688, %v688
        %v739 = vmul.f32 %v691, %v691
        %v740 = vmul.f32 %v696, %v696
        %v741 = vmul.f32 %v699, %v699
        %v742 = vmul.f32 %v704, %v704
        %v743 = vmul.f32 %v707, %v707
        %v744 = vmul.f32 %v712, %v712
        %v745 = vmul.f32 %v715, %v715
        %v746 = vmul.f32 %v720, %v720
        %v747 = vmul.f32 %v723, %v723
        %v748 = vmul.f32 %v728, %v728
        %v749 = vmul.f32 %v731, %v731
        %v750 = vadd.f32 %v734, %v735
        %v751 = vadd.f32 %v750, %v736
        %v752 = vadd.f32 %v751, %v737
        %v753 = vadd.f32 %v752, %v738
        %v754 = vadd.f32 %v753, %v739
        %v755 = vadd.f32 %v754, %v740
        %v756 = vadd.f32 %v755, %v741
        %v757 = vadd.f32 %v756, %v742
        %v758 = vadd.f32 %v757, %v743
        %v759 = vadd.f32 %v758, %v744
        %v760 = vadd.f32 %v759, %v745
        %v761 = vadd.f32 %v760, %v746
        %v762 = vadd.f32 %v761, %v747
        %v763 = vadd.f32 %v762, %v748
        %v764 = vadd.f32 %v763, %v749
        %v765 = vrot.slane %v764, 4
        %v766 = vadd.f32 %v764, %v765
        %v767 = vrot.slane %v766, 2
        %v768 = vadd.f32 %v766, %v767
        %v769 = vrot.slane %v768, 1
        %v770 = vadd.f32 %v768, %v769
        %v771 = vmax.f32 %v770, 1e-24
        %v772 = vrsqrt.pop %v771
        %v773 = vmul.f32 %v672, %v772
        %v774 = vmul.f32 %v675, %v772
        %v775 = vmul.f32 %v680, %v772
        %v776 = vmul.f32 %v683, %v772
        %v777 = vmul.f32 %v688, %v772
        %v778 = vmul.f32 %v691, %v772
        %v779 = vmul.f32 %v696, %v772
        %v780 = vmul.f32 %v699, %v772
        %v781 = vmul.f32 %v704, %v772
        %v782 = vmul.f32 %v707, %v772
        %v783 = vmul.f32 %v712, %v772
        %v784 = vmul.f32 %v715, %v772
        %v785 = vmul.f32 %v720, %v772
        %v786 = vmul.f32 %v723, %v772
        %v787 = vmul.f32 %v728, %v772
        %v788 = vmul.f32 %v731, %v772
        %789 = vst [vmem:[%s308] sm:$0xff] %v773
        %790 = vst [vmem:[%s308 + $0x8] sm:$0xff] %v774
        %791 = vst [vmem:[%s308 + $0x10] sm:$0xff] %v775
        %792 = vst [vmem:[%s308 + $0x18] sm:$0xff] %v776
        %793 = vst [vmem:[%s308 + $0x20] sm:$0xff] %v777
        %794 = vst [vmem:[%s308 + $0x28] sm:$0xff] %v778
        %795 = vst [vmem:[%s308 + $0x30] sm:$0xff] %v779
        %796 = vst [vmem:[%s308 + $0x38] sm:$0xff] %v780
        %797 = vst [vmem:[%s308 + $0x40] sm:$0xff] %v781
        %798 = vst [vmem:[%s308 + $0x48] sm:$0xff] %v782
        %799 = vst [vmem:[%s308 + $0x50] sm:$0xff] %v783
        %800 = vst [vmem:[%s308 + $0x58] sm:$0xff] %v784
        %801 = vst [vmem:[%s308 + $0x60] sm:$0xff] %v785
        %802 = vst [vmem:[%s308 + $0x68] sm:$0xff] %v786
        %803 = vst [vmem:[%s308 + $0x70] sm:$0xff] %v787
        %804 = vst [vmem:[%s308 + $0x78] sm:$0xff] %v788
        %v805 = vld [vmem:[%s279] sm:$0xf]
        %v806 = vld [vmem:[%s279 + $0x4] sm:$0xf]
        %v807 = vld [vmem:[%s279 + $0x8] sm:$0xf]
        %v808 = vld [vmem:[%s279 + $0xc] sm:$0xf]
        %v809 = vld [vmem:[%s279 + $0x10] sm:$0xf]
        %v810 = vld [vmem:[%s279 + $0x14] sm:$0xf]
        %v811 = vld [vmem:[%s279 + $0x18] sm:$0xf]
        %v812 = vld [vmem:[%s279 + $0x1c] sm:$0xf]
        %v813 = vld [vmem:[%s279 + $0x20] sm:$0xf]
        %v814 = vld [vmem:[%s279 + $0x24] sm:$0xf]
        %v815 = vld [vmem:[%s279 + $0x28] sm:$0xf]
        %v816 = vld [vmem:[%s279 + $0x2c] sm:$0xf]
        %v817 = vld [vmem:[%s279 + $0x30] sm:$0xf]
        %v818 = vld [vmem:[%s279 + $0x34] sm:$0xf]
        %v819 = vld [vmem:[%s279 + $0x38] sm:$0xf]
        %v820 = vld [vmem:[%s279 + $0x3c] sm:$0xf]
        %v821 = vld [vmem:[%s279 + $0x40] sm:$0xf]
        %v822 = vld [vmem:[%s279 + $0x44] sm:$0xf]
        %v823 = vld [vmem:[%s279 + $0x48] sm:$0xf]
        %v824 = vld [vmem:[%s279 + $0x4c] sm:$0xf]
        %v825 = vld [vmem:[%s279 + $0x50] sm:$0xf]
        %v826 = vld [vmem:[%s279 + $0x54] sm:$0xf]
        %v827 = vld [vmem:[%s279 + $0x58] sm:$0xf]
        %v828 = vld [vmem:[%s279 + $0x5c] sm:$0xf]
        %v829 = vld [vmem:[%s279 + $0x60] sm:$0xf]
        %v830 = vld [vmem:[%s279 + $0x64] sm:$0xf]
        %v831 = vld [vmem:[%s279 + $0x68] sm:$0xf]
        %v832 = vld [vmem:[%s279 + $0x6c] sm:$0xf]
        %v833 = vld [vmem:[%s279 + $0x70] sm:$0xf]
        %v834 = vld [vmem:[%s279 + $0x74] sm:$0xf]
        %v835 = vld [vmem:[%s279 + $0x78] sm:$0xf]
        %v836 = vld [vmem:[%s279 + $0x7c] sm:$0xf]
        %v869 = vunpack.c.l.b16 %v805
        %v870 = vunpack.c.l.b16 %v806
        %v871 = vunpack.c.l.b16 %v807
        %v872 = vunpack.c.l.b16 %v808
        %v873 = vunpack.c.l.b16 %v809
        %v874 = vunpack.c.l.b16 %v810
        %v875 = vunpack.c.l.b16 %v811
        %v876 = vunpack.c.l.b16 %v812
        %v877 = vunpack.c.l.b16 %v813
        %v878 = vunpack.c.l.b16 %v814
        %v879 = vunpack.c.l.b16 %v815
        %v880 = vunpack.c.l.b16 %v816
        %v881 = vunpack.c.l.b16 %v817
        %v882 = vunpack.c.l.b16 %v818
        %v883 = vunpack.c.l.b16 %v819
        %v884 = vunpack.c.l.b16 %v820
        %v885 = vunpack.c.l.b16 %v821
        %v886 = vunpack.c.l.b16 %v822
        %v887 = vunpack.c.l.b16 %v823
        %v888 = vunpack.c.l.b16 %v824
        %v889 = vunpack.c.l.b16 %v825
        %v890 = vunpack.c.l.b16 %v826
        %v891 = vunpack.c.l.b16 %v827
        %v892 = vunpack.c.l.b16 %v828
        %v893 = vunpack.c.l.b16 %v829
        %v894 = vunpack.c.l.b16 %v830
        %v895 = vunpack.c.l.b16 %v831
        %v896 = vunpack.c.l.b16 %v832
        %v897 = vunpack.c.l.b16 %v833
        %v898 = vunpack.c.l.b16 %v834
        %v899 = vunpack.c.l.b16 %v835
        %v900 = vunpack.c.l.b16 %v836
        %v901 = vpack.c.b16 %v870, %v869
        %v902 = vpack.c.b16 %v872, %v871
        %v903 = vpack.c.b16 %v874, %v873
        %v904 = vpack.c.b16 %v876, %v875
        %v905 = vpack.c.b16 %v878, %v877
        %v906 = vpack.c.b16 %v880, %v879
        %v907 = vpack.c.b16 %v882, %v881
        %v908 = vpack.c.b16 %v884, %v883
        %v909 = vpack.c.b16 %v886, %v885
        %v910 = vpack.c.b16 %v888, %v887
        %v911 = vpack.c.b16 %v890, %v889
        %v912 = vpack.c.b16 %v892, %v891
        %v913 = vpack.c.b16 %v894, %v893
        %v914 = vpack.c.b16 %v896, %v895
        %v915 = vpack.c.b16 %v898, %v897
        %v916 = vpack.c.b16 %v900, %v899
        %933 = vmatprep.subr.bf16.mxu0 0
        %934 = vmatpush1.bf16.msra.mxu0 %v908
        %935 = vmatprep.subr.bf16.mxu0 0
        %936 = vmatpush1.bf16.msra.mxu0 %v907
        %937 = vmatprep.subr.bf16.mxu0 0
        %938 = vmatpush1.bf16.msra.mxu0 %v906
        %939 = vmatprep.subr.bf16.mxu0 0
        %940 = vmatpush1.bf16.msra.mxu0 %v905
        %941 = vmatprep.subr.bf16.mxu0 0
        %942 = vmatpush1.bf16.msra.mxu0 %v904
        %943 = vmatprep.subr.bf16.mxu0 0
        %944 = vmatpush1.bf16.msra.mxu0 %v903
        %945 = vmatprep.subr.bf16.mxu0 0
        %946 = vmatpush1.bf16.msra.mxu0 %v902
        %947 = vmatprep.subr.bf16.mxu0 0
        %948 = vmatpush1.bf16.msra.mxu0 %v901
        %949 = vmatprep.subr.bf16.mxu0 0
        %950 = vmatpush2.bf16.msra.mxu0 %v916
        %951 = vmatprep.subr.bf16.mxu0 0
        %952 = vmatpush2.bf16.msra.mxu0 %v915
        %953 = vmatprep.subr.bf16.mxu0 0
        %954 = vmatpush2.bf16.msra.mxu0 %v914
        %955 = vmatprep.subr.bf16.mxu0 0
        %956 = vmatpush2.bf16.msra.mxu0 %v913
        %957 = vmatprep.subr.bf16.mxu0 0
        %958 = vmatpush2.bf16.msra.mxu0 %v912
        %959 = vmatprep.subr.bf16.mxu0 0
        %960 = vmatpush2.bf16.msra.mxu0 %v911
        %961 = vmatprep.subr.bf16.mxu0 0
        %962 = vmatpush2.bf16.msra.mxu0 %v910
        %963 = vmatprep.subr.bf16.mxu0 0
        %964 = vmatpush2.bf16.msra.mxu0 %v909
        %965 = vmatprep.mubr.bf16.mxu0 %v510
        %966 = vmatmul.mubr.bf16.gmra.mxu0 %v509
        %v967 = vpop.f32.mrf.mxu0
        %v968 = vadd.f32 %v384, %v967
        %v969 = vpop.f32.mrf.mxu0
        %v970 = vpop.f32.mrf.mxu0
        %v971 = vadd.f32 %v389, %v970
        %v972 = vpop.f32.mrf.mxu0
        %973 = vmatprep.mubr.bf16.mxu0 %v512
        %974 = vmatmul.mubr.bf16.gmra.mxu0 %v511
        %v975 = vpop.f32.mrf.mxu0
        %v976 = vadd.f32 %v394, %v975
        %v977 = vpop.f32.mrf.mxu0
        %v978 = vpop.f32.mrf.mxu0
        %v979 = vadd.f32 %v399, %v978
        %v980 = vpop.f32.mrf.mxu0
        %981 = vmatprep.mubr.bf16.mxu0 %v514
        %982 = vmatmul.mubr.bf16.gmra.mxu0 %v513
        %v983 = vpop.f32.mrf.mxu0
        %v984 = vadd.f32 %v404, %v983
        %v985 = vpop.f32.mrf.mxu0
        %v986 = vpop.f32.mrf.mxu0
        %v987 = vadd.f32 %v409, %v986
        %v988 = vpop.f32.mrf.mxu0
        %989 = vmatprep.mubr.bf16.mxu0 %v516
        %990 = vmatmul.mubr.bf16.gmra.mxu0 %v515
        %v991 = vpop.f32.mrf.mxu0
        %v992 = vadd.f32 %v414, %v991
        %v993 = vpop.f32.mrf.mxu0
        %v994 = vpop.f32.mrf.mxu0
        %v995 = vadd.f32 %v419, %v994
        %v996 = vpop.f32.mrf.mxu0
        %997 = vmatprep.mubr.bf16.mxu0 %v518
        %998 = vmatmul.mubr.bf16.gmra.mxu0 %v517
        %v999 = vpop.f32.mrf.mxu0
        %v1000 = vadd.f32 %v424, %v999
        %v1001 = vpop.f32.mrf.mxu0
        %v1002 = vpop.f32.mrf.mxu0
        %v1003 = vadd.f32 %v429, %v1002
        %v1004 = vpop.f32.mrf.mxu0
        %1005 = vmatprep.mubr.bf16.mxu0 %v520
        %1006 = vmatmul.mubr.bf16.gmra.mxu0 %v519
        %v1007 = vpop.f32.mrf.mxu0
        %v1008 = vadd.f32 %v434, %v1007
        %v1009 = vpop.f32.mrf.mxu0
        %v1010 = vpop.f32.mrf.mxu0
        %v1011 = vadd.f32 %v439, %v1010
        %v1012 = vpop.f32.mrf.mxu0
        %1013 = vmatprep.mubr.bf16.mxu0 %v522
        %1014 = vmatmul.mubr.bf16.gmra.mxu0 %v521
        %v1015 = vpop.f32.mrf.mxu0
        %v1016 = vadd.f32 %v444, %v1015
        %v1017 = vpop.f32.mrf.mxu0
        %v1018 = vpop.f32.mrf.mxu0
        %v1019 = vadd.f32 %v449, %v1018
        %v1020 = vpop.f32.mrf.mxu0
        %1021 = vmatprep.mubr.bf16.mxu0 %v524
        %1022 = vmatmul.mubr.bf16.gmra.mxu0 %v523
        %v1023 = vpop.f32.mrf.mxu0
        %v1024 = vadd.f32 %v454, %v1023
        %v1025 = vpop.f32.mrf.mxu0
        %v1026 = vpop.f32.mrf.mxu0
        %v1027 = vadd.f32 %v459, %v1026
        %v1028 = vpop.f32.mrf.mxu0
        %1029 = vdwg.mxu0
        %v1030 = vmul.f32 %v968, %v968
        %v1031 = vmul.f32 %v971, %v971
        %v1032 = vmul.f32 %v976, %v976
        %v1033 = vmul.f32 %v979, %v979
        %v1034 = vmul.f32 %v984, %v984
        %v1035 = vmul.f32 %v987, %v987
        %v1036 = vmul.f32 %v992, %v992
        %v1037 = vmul.f32 %v995, %v995
        %v1038 = vmul.f32 %v1000, %v1000
        %v1039 = vmul.f32 %v1003, %v1003
        %v1040 = vmul.f32 %v1008, %v1008
        %v1041 = vmul.f32 %v1011, %v1011
        %v1042 = vmul.f32 %v1016, %v1016
        %v1043 = vmul.f32 %v1019, %v1019
        %v1044 = vmul.f32 %v1024, %v1024
        %v1045 = vmul.f32 %v1027, %v1027
        %v1046 = vadd.f32 %v1030, %v1031
        %v1047 = vadd.f32 %v1046, %v1032
        %v1048 = vadd.f32 %v1047, %v1033
        %v1049 = vadd.f32 %v1048, %v1034
        %v1050 = vadd.f32 %v1049, %v1035
        %v1051 = vadd.f32 %v1050, %v1036
        %v1052 = vadd.f32 %v1051, %v1037
        %v1053 = vadd.f32 %v1052, %v1038
        %v1054 = vadd.f32 %v1053, %v1039
        %v1055 = vadd.f32 %v1054, %v1040
        %v1056 = vadd.f32 %v1055, %v1041
        %v1057 = vadd.f32 %v1056, %v1042
        %v1058 = vadd.f32 %v1057, %v1043
        %v1059 = vadd.f32 %v1058, %v1044
        %v1060 = vadd.f32 %v1059, %v1045
        %v1061 = vrot.slane %v1060, 4
        %v1062 = vadd.f32 %v1060, %v1061
        %v1063 = vrot.slane %v1062, 2
        %v1064 = vadd.f32 %v1062, %v1063
        %v1065 = vrot.slane %v1064, 1
        %v1066 = vadd.f32 %v1064, %v1065
        %v1067 = vmax.f32 %v1066, 1e-24
        %v1068 = vrsqrt.pop %v1067
        %v1069 = vmul.f32 %v968, %v1068
        %v1070 = vmul.f32 %v971, %v1068
        %v1071 = vmul.f32 %v976, %v1068
        %v1072 = vmul.f32 %v979, %v1068
        %v1073 = vmul.f32 %v984, %v1068
        %v1074 = vmul.f32 %v987, %v1068
        %v1075 = vmul.f32 %v992, %v1068
        %v1076 = vmul.f32 %v995, %v1068
        %v1077 = vmul.f32 %v1000, %v1068
        %v1078 = vmul.f32 %v1003, %v1068
        %v1079 = vmul.f32 %v1008, %v1068
        %v1080 = vmul.f32 %v1011, %v1068
        %v1081 = vmul.f32 %v1016, %v1068
        %v1082 = vmul.f32 %v1019, %v1068
        %v1083 = vmul.f32 %v1024, %v1068
        %v1084 = vmul.f32 %v1027, %v1068
        %1085 = vst [vmem:[%s315] sm:$0xff] %v1069
        %1086 = vst [vmem:[%s315 + $0x8] sm:$0xff] %v1070
        %1087 = vst [vmem:[%s315 + $0x10] sm:$0xff] %v1071
        %1088 = vst [vmem:[%s315 + $0x18] sm:$0xff] %v1072
        %1089 = vst [vmem:[%s315 + $0x20] sm:$0xff] %v1073
        %1090 = vst [vmem:[%s315 + $0x28] sm:$0xff] %v1074
        %1091 = vst [vmem:[%s315 + $0x30] sm:$0xff] %v1075
        %1092 = vst [vmem:[%s315 + $0x38] sm:$0xff] %v1076
        %1093 = vst [vmem:[%s315 + $0x40] sm:$0xff] %v1077
        %1094 = vst [vmem:[%s315 + $0x48] sm:$0xff] %v1078
        %1095 = vst [vmem:[%s315 + $0x50] sm:$0xff] %v1079
        %1096 = vst [vmem:[%s315 + $0x58] sm:$0xff] %v1080
        %1097 = vst [vmem:[%s315 + $0x60] sm:$0xff] %v1081
        %1098 = vst [vmem:[%s315 + $0x68] sm:$0xff] %v1082
        %1099 = vst [vmem:[%s315 + $0x70] sm:$0xff] %v1083
        %1100 = vst [vmem:[%s315 + $0x78] sm:$0xff] %v1084
        %s1101 = sand.u32 %s149, 1
        %s1102 = scalar_lea.sflag [#allocation4], %s1101
        %s1103 = sand.u32 %s149, 1
        %s1104 = smul.addr %s1103, 128
        %s1105 = scalar_lea.vmem [#allocation7], %s1104
        %s1106 = sand.u32 %s177, 1
        %s1107 = scalar_lea.sflag [#allocation9], %s1106
        %s1108 = sand.u32 %s177, 1
        %s1109 = smul.addr %s1108, 128
        %s1110 = scalar_lea.vmem [#allocation8], %s1109
        // Predicated region
        $region45: #{tpu_custom_call.1} parent=35 // pred_check
          %p1111 = pneg %p159
        $region46: #{tpu_custom_call.1} parent=35 // pred_check_branch
          %1113 = sbr.rel (%p1111) target = $region48
        $region47: #{tpu_custom_call.1} parent=35 // pred_region
          %s1115 = ssub.s32 2048, 2048
          %1116 = vsyncadd %s1102, %s1115
          %s1117 = smul.addr %s33, 16
          %s1118 = sadd.s32 %s34, %s1117
          %s1119 = smul.addr %s1118, 128
          %s1120 = scalar_lea.hbm %s4, %s1119
          %s1121 = sshll.u32 %s1105, 4
          %s1122 = int_to_ptr.vmem [resolvable:$true] %s1121
          %1127 = dma.vmem_to_hbm [thread:$0]  %s1122, 2048, %s1120, %s1102, 128, 128, 8
        $region48: #{tpu_custom_call.1} parent=35 // pred_fallthru
          _
        // Predicated region
        $region49: #{tpu_custom_call.1} parent=35 // pred_check
          %p1128 = pneg %p187
        $region50: #{tpu_custom_call.1} parent=35 // pred_check_branch
          %1130 = sbr.rel (%p1128) target = $region52
        $region51: #{tpu_custom_call.1} parent=35 // pred_region
          %s1132 = ssub.s32 2048, 2048
          %1133 = vsyncadd %s1107, %s1132
          %s1134 = smul.addr %s33, 16
          %s1135 = sadd.s32 %s34, %s1134
          %s1136 = smul.addr %s1135, 128
          %s1137 = scalar_lea.hbm %s5, %s1136
          %s1138 = sshll.u32 %s1110, 4
          %s1139 = int_to_ptr.vmem [resolvable:$true] %s1138
          %1144 = dma.vmem_to_hbm [thread:$0]  %s1139, 2048, %s1137, %s1107, 128, 128, 8
        $region52: #{tpu_custom_call.1} parent=35 // pred_fallthru
          _
      $region36: #{tpu_custom_call.1} parent=5 // pred_fallthru
        _
      %p1145 = scmp.le.s32.totalorder 2, %s24
      // Predicated region
      $region53: #{tpu_custom_call.1} parent=5 // pred_check
        %p1146 = pneg %p1145
      $region54: #{tpu_custom_call.1} parent=5 // pred_check_branch
        %1148 = sbr.rel (%p1146) target = $region56
      $region55: #{tpu_custom_call.1} parent=5 // pred_region
        %s1149 = ssub.s32 %s24, 2
        // Predicated region
        $region57: #{tpu_custom_call.1} parent=55 // pred_check
          %p1150 = pneg %p165
        $region58: #{tpu_custom_call.1} parent=55 // pred_check_branch
          %1152 = sbr.rel (%p1150) target = $region60
        $region59: #{tpu_custom_call.1} parent=55 // pred_region
          %s1153 = sand.u32 %s150, 1
          %s1154 = scalar_lea.sflag [#allocation4], %s1153
          %s1155 = sand.u32 %s150, 1
          %s1156 = smul.addr %s1155, 128
          %s1157 = scalar_lea.vmem [#allocation7], %s1156
          %1158 = dma.done %s1154, 2048
        $region60: #{tpu_custom_call.1} parent=55 // pred_fallthru
          _
        // Predicated region
        $region61: #{tpu_custom_call.1} parent=55 // pred_check
          %p1159 = pneg %p193
        $region62: #{tpu_custom_call.1} parent=55 // pred_check_branch
          %1161 = sbr.rel (%p1159) target = $region64
        $region63: #{tpu_custom_call.1} parent=55 // pred_region
          %s1162 = sand.u32 %s178, 1
          %s1163 = scalar_lea.sflag [#allocation9], %s1162
          %s1164 = sand.u32 %s178, 1
          %s1165 = smul.addr %s1164, 128
          %s1166 = scalar_lea.vmem [#allocation8], %s1165
          %1167 = dma.done %s1163, 2048
        $region64: #{tpu_custom_call.1} parent=55 // pred_fallthru
          _
      $region56: #{tpu_custom_call.1} parent=5 // pred_fallthru
        _
    $region6: #{tpu_custom_call.1} parent=1 // loop_footer
      %s28 = sadd.s32 1, %s24
    $region7: #{tpu_custom_call.1} parent=1 // loop_footer_branch
      %23 = sbr.rel target = $region3
    $region8: #{tpu_custom_call.1} parent=1 // loop_exit
      _
    %1168 = vsyncpa [#allocation3], 1
    %s1169 = scalar_lea.sflag [#allocation3], 1
    %1170 = vsyncpa %s1169, 1
    %1171 = vsyncpa [#allocation6], 1
    %s1172 = scalar_lea.sflag [#allocation6], 1
    %1173 = vsyncpa %s1172, 1
    %1174 = vsyncpa [#allocation4], 1
    %s1175 = scalar_lea.sflag [#allocation4], 1
    %1176 = vsyncpa %s1175, 1
    %1177 = vsyncpa [#allocation9], 1
    %s1178 = scalar_lea.sflag [#allocation9], 1
    %1179 = vsyncpa %s1178, 1

</llo_original>
